<compile_context>
chip_gen: v7x
topology: tpu7x:2x2x1
jax: 0.10.0
libtpu: 0.0.40
codegen_flags: <defaults>
</compile_context>

<pallas_src>
import math
import functools

import jax
import jax.numpy as jnp
from jax.experimental import pallas as pl
from jax.experimental.pallas import tpu as pltpu


# ---------------------------------------------------------------------------
# PE table (identical to the PyTorch __init__)
# ---------------------------------------------------------------------------
def make_positional_encoding_table(d_model: int, max_len: int) -> jnp.ndarray:
    position = jnp.arange(0, max_len, dtype=jnp.float32)[:, None]          # (max_len, 1)
    div_term = jnp.exp(
        jnp.arange(0, d_model, 2, dtype=jnp.float32)
        * -(math.log(10000.0) / d_model)
    )                                                                       # (d_model/2,)
    pe = jnp.zeros((max_len, d_model), dtype=jnp.float32)
    pe = pe.at[:, 0::2].set(jnp.sin(position * div_term))
    pe = pe.at[:, 1::2].set(jnp.cos(position * div_term))
    return pe                                                               # (max_len, d_model)


# ---------------------------------------------------------------------------
# Kernel bodies (static config baked in as Python scalars -> jaxpr Literals)
# ---------------------------------------------------------------------------
def _make_kernel(use_dropout: bool, inv_keep: float, threshold: int):
    if use_dropout:

        def kernel(x_ref, pe_ref, bits_ref, o_ref):
            # x_ref/bits_ref/o_ref: (BB, TR, C); pe_ref: (TR, C)
            val = x_ref[...] + pe_ref[...]                 # stays in x.dtype
            keep = bits_ref[...] >= threshold              # P(drop) = threshold / 256
            o_ref[...] = jnp.where(keep, val * inv_keep, 0.0).astype(o_ref.dtype)
    else:

        def kernel(x_ref, pe_ref, o_ref):
            o_ref[...] = (x_ref[...] + pe_ref[...]).astype(o_ref.dtype)

    return kernel


# ---------------------------------------------------------------------------
# Tile-size heuristic
# ---------------------------------------------------------------------------
def _choose_row_tile(R: int, row_block_bytes: int) -> int:
    """Rows per block: ~4 MiB per x block, sublane-friendly, keep a few steps."""
    budget = 4 << 20
    tr = budget // max(1, row_block_bytes)
    if tr >= R:
        return R
    tr = max(8, (tr // 8) * 8)
    if tr >= 32:
        tr = (tr // 32) * 32          # friendlier layout for the packed uint8 mask
    # Keep at least ~4 row tiles when the data is large enough, so the pipeline
    # has steps to overlap and v7x's two TensorCores both get work.
    if pl.cdiv(R, tr) < 4 and R >= 32:
        tr = max(8, ((pl.cdiv(R, 4) + 7) // 8) * 8)
    return min(tr, R)


# ---------------------------------------------------------------------------
# Wrapper
# ---------------------------------------------------------------------------
@functools.partial(jax.jit, static_argnames=("p", "training"))
def positional_encoding_forward(x, pe, key, *, p: float, training: bool):
    """x: (B, S, D); pe: (max_len, D); key: jax PRNG key (used only if training)."""
    B, S, D = x.shape
    use_dropout = bool(training) and p > 0.0

    pe_slice = pe[:S, :].astype(x.dtype)                   # glue stays in plain JAX

    # Lane-dense view: (B, R, C) with C = 128 whenever possible.
    total = S * D
    if total % 128 == 0:
        R, C = total // 128, 128
    else:
        R, C = S, D                                        # fallback (see TODO above)
    x_k = x.reshape(B, R, C)
    pe_k = pe_slice.reshape(R, C)

    itemsize = jnp.dtype(x.dtype).itemsize

    # Fold the whole batch into each block when even an 8-row tile across the
    # full batch fits the ~4 MiB budget (fewer grid steps, pe fetched once).
    fold_batch = (B * C * itemsize * 8) <= (4 << 20)
    BB = B if fold_batch else 1
    TR = _choose_row_tile(R, BB * C * itemsize)
    n_r = pl.cdiv(R, TR)

    if fold_batch:
        grid = (n_r,)
        x_spec = pl.BlockSpec((B, TR, C), lambda r: (0, r, 0))
        pe_spec = pl.BlockSpec((TR, C), lambda r: (r, 0))
        out_spec = pl.BlockSpec((B, TR, C), lambda r: (0, r, 0))
        bits_spec = pl.BlockSpec((B, TR, C), lambda r: (0, r, 0))
        dims = ("parallel",)
    else:
        grid = (n_r, B)                                    # row-tile outer: pe stays resident
        x_spec = pl.BlockSpec((1, TR, C), lambda r, b: (b, r, 0))
        pe_spec = pl.BlockSpec((TR, C), lambda r, b: (r, 0))
        out_spec = pl.BlockSpec((1, TR, C), lambda r, b: (b, r, 0))
        bits_spec = pl.BlockSpec((1, TR, C), lambda r, b: (b, r, 0))
        dims = ("parallel", "parallel")

    inputs = [x_k, pe_k]
    in_specs = [x_spec, pe_spec]
    if use_dropout:
        bits = jax.random.bits(key, (B, R, C), dtype=jnp.uint8)
        inputs.append(bits)
        in_specs.append(bits_spec)

    # Dropout config as plain Python scalars (become jaxpr Literals, not
    # captured constants).
    threshold = min(int(round(p * 256.0)), 255)            # P(drop) = threshold / 256
    inv_keep = (1.0 / (1.0 - p)) if p < 1.0 else 0.0
    kernel = _make_kernel(use_dropout, inv_keep, threshold)

    # Advisory cost estimate (purely HBM-bandwidth bound).
    elems = B * R * C
    bytes_accessed = (2 * elems + R * C) * itemsize + (elems if use_dropout else 0)
    cost = pl.CostEstimate(flops=(4 if use_dropout else 1) * elems,
                           transcendentals=0,
                           bytes_accessed=bytes_accessed)

    # VMEM budget from the actual block sizes (double-buffered x/out/pe/bits),
    # with 2x headroom, capped at 48 MiB (safe under v7x's 64 MiB physical VMEM).
    x_blk = BB * TR * C * itemsize
    pe_blk = TR * C * itemsize
    bits_blk = BB * TR * C if use_dropout else 0
    vmem_est = 2 * (2 * x_blk + pe_blk + bits_blk)
    vmem_limit = int(min(max(2 * vmem_est, 16 << 20), 48 << 20))

    out = pl.pallas_call(
        kernel,
        out_shape=jax.ShapeDtypeStruct((B, R, C), x.dtype),
        grid=grid,
        in_specs=in_specs,
        out_specs=out_spec,
        compiler_params=pltpu.CompilerParams(
            dimension_semantics=dims,
            vmem_limit_bytes=vmem_limit,
        ),
        cost_estimate=cost,
    )(*inputs)

    return out.reshape(B, S, D)


# ---------------------------------------------------------------------------
# Demo / self-test
# ---------------------------------------------------------------------------
if __name__ == "__main__":
    B, S, D, MAX_LEN = 2, 8, 32, 16
    DROPOUT_P = 0.1

    key = jax.random.PRNGKey(0)
    k_x, k_drop = jax.random.split(key)
    x = jax.random.normal(k_x, (B, S, D), dtype=jnp.float32)
    pe = make_positional_encoding_table(D, MAX_LEN)

    # Eval mode: dropout == identity, must match plain-JAX reference exactly.
    out_eval = positional_encoding_forward(x, pe, k_drop, p=DROPOUT_P, training=False)
    out_eval = jax.block_until_ready(out_eval)
    ref = x + pe[:S, :][None, :, :]
    assert jnp.allclose(out_eval, ref, atol=1e-6), "eval-path mismatch"

    # Training mode: every output element is either 0 (dropped) or ref/(1-p).
    out_train = positional_encoding_forward(x, pe, k_drop, p=DROPOUT_P, training=True)
    out_train = jax.block_until_ready(out_train)
    scaled = ref * (1.0 / (1.0 - DROPOUT_P))
    ok = jnp.isclose(out_train, scaled, atol=1e-5) | (out_train == 0.0)
    assert bool(jnp.all(ok)), "training-path mismatch"

    print("KERNEL_OK")
</pallas_src>

<mosaic_0001>
module attributes {stable_mosaic.version = 11 : i64} {
  func.func @kernel(%arg0: i32, %arg1: memref<2x2x128xf32, #tpu.memory_space<vmem>>, %arg2: memref<2x128xf32, #tpu.memory_space<vmem>>, %arg3: memref<2x2x128xf32, #tpu.memory_space<vmem>>) attributes {dimension_semantics = [#tpu.dimension_semantics<parallel>], iteration_bounds = array<i64: 1>, scalar_prefetch = 0 : i64, scratch_operands = 0 : i64, tpu.core_type = #tpu.core_type<tc>, window_params = [{transform_indices = @transform_0, window_bounds = array<i64: 2, 2, 128>}, {transform_indices = @transform_1, window_bounds = array<i64: 2, 128>}, {transform_indices = @transform_2, window_bounds = array<i64: 2, 2, 128>}]} {
    %c0 = arith.constant 0 : index
    %c0_0 = arith.constant 0 : index
    %c0_1 = arith.constant 0 : index
    %0 = vector.load %arg1[%c0, %c0_0, %c0_1] : memref<2x2x128xf32, #tpu.memory_space<vmem>>, vector<2x2x128xf32>
    %c0_2 = arith.constant 0 : index
    %c0_3 = arith.constant 0 : index
    %1 = vector.load %arg2[%c0_2, %c0_3] : memref<2x128xf32, #tpu.memory_space<vmem>>, vector<2x128xf32>
    %2 = vector.shape_cast %1 : vector<2x128xf32> to vector<1x2x128xf32>
    %3 = vector.broadcast %2 : vector<1x2x128xf32> to vector<2x2x128xf32>
    %4 = arith.addf %0, %3 : vector<2x2x128xf32>
    %c0_4 = arith.constant 0 : index
    %c0_5 = arith.constant 0 : index
    %c0_6 = arith.constant 0 : index
    %5 = vector.load %arg3[%c0_4, %c0_5, %c0_6] : memref<2x2x128xf32, #tpu.memory_space<vmem>>, vector<2x2x128xf32>
    tpu.vector_store %arg3[%c0_4, %c0_5, %c0_6], %4 {strides = array<i32>} : memref<2x2x128xf32, #tpu.memory_space<vmem>>, vector<2x2x128xf32>,
    return
  }
  func.func @transform_0(%arg0: i32) -> (i32, i32, i32) {
    %c0_i32 = arith.constant 0 : i32
    %c0_i32_0 = arith.constant 0 : i32
    %c0_i32_1 = arith.constant 0 : i32
    return %c0_i32, %arg0, %c0_i32_0 : i32, i32, i32
  }
  func.func @transform_1(%arg0: i32) -> (i32, i32) {
    %c0_i32 = arith.constant 0 : i32
    %c0_i32_0 = arith.constant 0 : i32
    return %arg0, %c0_i32 : i32, i32
  }
  func.func @transform_2(%arg0: i32) -> (i32, i32, i32) {
    %c0_i32 = arith.constant 0 : i32
    %c0_i32_0 = arith.constant 0 : i32
    %c0_i32_1 = arith.constant 0 : i32
    return %c0_i32, %arg0, %c0_i32_0 : i32, i32, i32
  }
}

</mosaic_0001>

<llo_original>
// kernel: positional_encoding_forward.1
$region0: #{positional_encoding_forward.1}
  #allocation0 [shape = 'u32[]', space=smem, size = 0x4, offset = 0x4, fixed_abs, tag = 'smem constant byte address 0x4 - core index']
  #allocation1 [shape = 'u32[144,128]{1,0:T(1,128)}', space=vmem, size = 0x12000, scoped, tag = 'internal scratch']
  %s0 = inlined_call_operand.vmem [shape: f32[2,2,128], index: 0, kind: input, shape index: {}]
  %s1 = inlined_call_operand.vmem [shape: f32[2,128], index: 1, kind: input, shape index: {}]
  %s2 = inlined_call_operand.vmem [shape: f32[2,2,128], index: 2, kind: output, shape index: {}]
  %s3 = sld [smem:[#allocation0]]
  $region18: #{positional_encoding_forward.1} parent=0
    _
  %s5 = ssub.s32 1, %s3
  %s6 = scalar_select 0, %s5, %s3
  // Predicated region
  $region2: #{positional_encoding_forward.1} parent=0 // pred_check
    _
  $region3: #{positional_encoding_forward.1} parent=0 // pred_check_branch
    %8 = sbr.rel (0) target = $region5
  $region4: #{positional_encoding_forward.1} parent=0 // pred_region
    _
  $region5: #{positional_encoding_forward.1} parent=0 // pred_fallthru
    _
  // Predicated region
  $region6: #{positional_encoding_forward.1} parent=0 // pred_check
    _
  $region7: #{positional_encoding_forward.1} parent=0 // pred_check_branch
    %10 = sbr.rel (0) target = $region9
  $region8: #{positional_encoding_forward.1} parent=0 // pred_region
    _
  $region9: #{positional_encoding_forward.1} parent=0 // pred_fallthru
    _
  %v11 = vld [vmem:[%s0] sm:$0x3]
  %v12 = vld [vmem:[%s0 + $0x2] sm:$0x3]
  %v13 = vld [vmem:[%s1] sm:$0x3]
  %v14 = vadd.f32 %v11, %v13
  %v15 = vadd.f32 %v12, %v13
  %16 = vst [vmem:[%s2] sm:$0x3] %v14
  %17 = vst [vmem:[%s2 + $0x2] sm:$0x3] %v15
  // Predicated region
  $region10: #{positional_encoding_forward.1} parent=0 // pred_check
    _
  $region11: #{positional_encoding_forward.1} parent=0 // pred_check_branch
    %19 = sbr.rel (0) target = $region13
  $region12: #{positional_encoding_forward.1} parent=0 // pred_region
    _
  $region13: #{positional_encoding_forward.1} parent=0 // pred_fallthru
    _
  // Predicated region
  $region14: #{positional_encoding_forward.1} parent=0 // pred_check
    _
  $region15: #{positional_encoding_forward.1} parent=0 // pred_check_branch
    %21 = sbr.rel (0) target = $region17
  $region16: #{positional_encoding_forward.1} parent=0 // pred_region
    _
  $region17: #{positional_encoding_forward.1} parent=0 // pred_fallthru
    _

</llo_original>
